<compile_context>
chip_gen: v7x
topology: tpu7x:2x2x1
jax: 0.10.0
libtpu: 0.0.40
codegen_flags: <defaults>
</compile_context>

<pallas_src>
import math

import jax
import jax.numpy as jnp
from jax.experimental import pallas as pl
from jax.experimental.pallas import tpu as pltpu


def _range_kernel(params_ref, x_ref, o_ref):
    # params_ref: SMEM f32[2] = [offset (val_min), scale (val_max - val_min)]
    offset = params_ref[0]
    scale = params_ref[1]
    x = x_ref[...].astype(jnp.float32)
    o_ref[...] = (offset + x * scale).astype(o_ref.dtype)


def _min_sublane(dt) -> int:
    # Packed sub-32-bit rows need 16 (bf16/f16) or 32 (int8/fp8) sublanes for
    # unmasked stores; 8 for 32-bit types.
    return max(8, 32 // jnp.dtype(dt).itemsize)


def _target_block_bytes() -> int:
    # Constant-byte blocks per chip generation. 2 MiB keeps double-buffered
    # in+out under v5e's 16 MiB default scoped VMEM; 4 MiB fits easily under
    # the 32 MiB default on v6e / v7x (no extra compiler flags needed).
    try:
        kind = jax.devices()[0].device_kind.lower()
    except Exception:
        kind = ""
    if any(tag in kind for tag in ("v2", "v3", "v4", "v5")):
        return 2 << 20
    return 4 << 20


def to_tensor_range(img: jax.Array,
                    val_min: float = -1.0,
                    val_max: float = 1.0,
                    dtype=jnp.float32,
                    *,
                    min_pallas_bytes: int = 1 << 20) -> jax.Array:
    """Pallas implementation of ToTensor_range.forward (tensor-input path)."""
    out_dtype = jnp.dtype(dtype)
    scale = float(val_max) - float(val_min)
    orig_shape = img.shape
    total = int(math.prod(orig_shape)) if orig_shape else 1
    in_itemsize = jnp.dtype(img.dtype).itemsize

    def _xla_affine(x):
        # Note: integer out_dtype truncates toward zero (matches torch .to()).
        return (val_min + x.astype(jnp.float32) * scale).astype(out_dtype)

    # Tiny inputs: pallas_call fixed overhead dominates; let XLA fuse it.
    if total < 128 or total * in_itemsize < min_pallas_bytes:
        return _xla_affine(img)

    flat = jnp.reshape(img, (total,))

    # Widest lane-dense last dim. Prefer exact division; otherwise split into
    # a lane-aligned head (Pallas) and a < lane-sized tail (plain jnp).
    lane = next((c for c in (1024, 512, 256, 128) if total % c == 0), None)
    if lane is None:
        lane = next(c for c in (1024, 512, 256, 128) if total >= c)
    head = (total // lane) * lane
    tail = total - head

    x_head = flat if tail == 0 else flat[:head]
    rows = head // lane
    x2d = jnp.reshape(x_head, (rows, lane))

    # Constant-byte row tiling, rounded to the dtype-aware sublane multiple.
    SUB = max(_min_sublane(img.dtype), _min_sublane(out_dtype))
    elem_bytes = max(in_itemsize, out_dtype.itemsize)
    target_bytes = _target_block_bytes()
    max_rows = max(SUB, (target_bytes // (lane * elem_bytes)) // SUB * SUB)
    if rows <= SUB:
        tile_r = rows  # full-extent rows (tiny slab) -- always legal
    else:
        tile_r = min(max_rows, (rows // SUB) * SUB)
        # v7x megacore: a 1-step grid leaves a TensorCore idle; split it.
        if pl.cdiv(rows, tile_r) == 1 and rows >= 2 * SUB:
            half = (rows + 1) // 2
            tile_r = max(SUB, ((half + SUB - 1) // SUB) * SUB)
    grid = (pl.cdiv(rows, tile_r),)

    # Range parameters as SMEM scalars (no recompile per (val_min, val_max)).
    params = jnp.array([val_min, scale], dtype=jnp.float32)

    out2d = pl.pallas_call(
        _range_kernel,
        out_shape=jax.ShapeDtypeStruct((rows, lane), out_dtype),
        grid_spec=pl.GridSpec(
            grid=grid,
            in_specs=[
                pl.BlockSpec(memory_space=pltpu.MemorySpace.SMEM),
                pl.BlockSpec((tile_r, lane), lambda i: (i, 0)),
            ],
            out_specs=pl.BlockSpec((tile_r, lane), lambda i: (i, 0)),
        ),
        compiler_params=pltpu.CompilerParams(
            dimension_semantics=("parallel",)),
    )(params, x2d)

    head_out = jnp.reshape(out2d, (head,))
    if tail == 0:
        return jnp.reshape(head_out, orig_shape)
    tail_out = _xla_affine(flat[head:])
    return jnp.reshape(jnp.concatenate([head_out, tail_out]), orig_shape)


if __name__ == "__main__":
    key = jax.random.PRNGKey(0)
    k1, k2, k3 = jax.random.split(key, 3)

    # 1) Canonical small NCHW image in [0, 1] (as F.to_tensor would produce).
    #    Tiny input -> fused-XLA bypass path.
    x = jax.random.uniform(k1, (2, 4, 16, 16), dtype=jnp.float32)
    val_min, val_max = -1.0, 1.0
    ref = val_min + x * (val_max - val_min)
    out = jax.block_until_ready(to_tensor_range(x, val_min, val_max))
    assert out.shape == x.shape and out.dtype == jnp.float32
    assert float(jnp.max(jnp.abs(out - ref))) < 1e-6

    # Same small input forced through the Pallas kernel path.
    out_k = jax.block_until_ready(
        to_tensor_range(x, val_min, val_max, min_pallas_bytes=0))
    assert float(jnp.max(jnp.abs(out_k - ref))) < 1e-6

    # bf16 output: cast fused into the kernel store, dtype-aware sublane tile.
    out_bf16 = jax.block_until_ready(
        to_tensor_range(x, val_min, val_max, dtype=jnp.bfloat16,
                        min_pallas_bytes=0))
    assert out_bf16.dtype == jnp.bfloat16
    assert float(jnp.max(jnp.abs(out_bf16.astype(jnp.float32) - ref))) < 1e-2

    # 2) Medium 128-aligned image batch: multi-step pipelined kernel path.
    y = jax.random.uniform(k2, (2, 3, 512, 512), dtype=jnp.float32)
    out_y = jax.block_until_ready(to_tensor_range(y, 0.0, 255.0))
    ref_y = y * 255.0
    assert out_y.shape == y.shape and out_y.dtype == jnp.float32
    assert float(jnp.max(jnp.abs(out_y - ref_y))) < 1e-3

    # 3) Ragged element count above the bypass threshold:
    #    Pallas kernel on the lane-aligned head + jnp tail (no pad/slice pass).
    z = jax.random.uniform(k3, (3, 3, 257, 259), dtype=jnp.float32)
    out_z = jax.block_until_ready(to_tensor_range(z, -1.0, 1.0))
    ref_z = -1.0 + z * 2.0
    assert out_z.shape == z.shape
    assert float(jnp.max(jnp.abs(out_z - ref_z))) < 1e-6

    print("KERNEL_OK")
</pallas_src>

<mosaic_0001>
module attributes {stable_mosaic.version = 11 : i64} {
  func.func @_range_kernel(%arg0: i32, %arg1: memref<2xf32, #tpu.memory_space<smem>>, %arg2: memref<2x1024xf32, #tpu.memory_space<vmem>>, %arg3: memref<2x1024xf32, #tpu.memory_space<vmem>>) attributes {dimension_semantics = [#tpu.dimension_semantics<parallel>], iteration_bounds = array<i64: 1>, scalar_prefetch = 0 : i64, scratch_operands = 0 : i64, tpu.core_type = #tpu.core_type<tc>, window_params = [{transform_indices = @transform_0, window_bounds = array<i64: 2>}, {transform_indices = @transform_1, window_bounds = array<i64: 2, 1024>}, {transform_indices = @transform_2, window_bounds = array<i64: 2, 1024>}]} {
    %c0 = arith.constant 0 : index
    %0 = memref.load %arg1[%c0] : memref<2xf32, #tpu.memory_space<smem>>
    %c1 = arith.constant 1 : index
    %1 = memref.load %arg1[%c1] : memref<2xf32, #tpu.memory_space<smem>>
    %c0_0 = arith.constant 0 : index
    %c0_1 = arith.constant 0 : index
    %2 = vector.load %arg2[%c0_0, %c0_1] : memref<2x1024xf32, #tpu.memory_space<vmem>>, vector<2x1024xf32>
    %3 = vector.broadcast %1 : f32 to vector<2x1024xf32>
    %4 = arith.mulf %2, %3 : vector<2x1024xf32>
    %5 = vector.broadcast %0 : f32 to vector<2x1024xf32>
    %6 = arith.addf %5, %4 : vector<2x1024xf32>
    %c0_2 = arith.constant 0 : index
    %c0_3 = arith.constant 0 : index
    %7 = vector.load %arg3[%c0_2, %c0_3] : memref<2x1024xf32, #tpu.memory_space<vmem>>, vector<2x1024xf32>
    tpu.vector_store %arg3[%c0_2, %c0_3], %6 {strides = array<i32>} : memref<2x1024xf32, #tpu.memory_space<vmem>>, vector<2x1024xf32>,
    return
  }
  func.func @transform_0(%arg0: i32) -> i32 {
    %c0_i32 = arith.constant 0 : i32
    %c0_i32_0 = arith.constant 0 : i32
    return %c0_i32 : i32
  }
  func.func @transform_1(%arg0: i32) -> (i32, i32) {
    %c0_i32 = arith.constant 0 : i32
    %c0_i32_0 = arith.constant 0 : i32
    return %arg0, %c0_i32 : i32, i32
  }
  func.func @transform_2(%arg0: i32) -> (i32, i32) {
    %c0_i32 = arith.constant 0 : i32
    %c0_i32_0 = arith.constant 0 : i32
    return %arg0, %c0_i32 : i32, i32
  }
}

</mosaic_0001>

<llo_original>
// kernel: tpu_custom_call.1
$region0: #{tpu_custom_call.1}
  #allocation0 [shape = 'u32[]', space=smem, size = 0x4, offset = 0x4, fixed_abs, tag = 'smem constant byte address 0x4 - core index']
  #allocation1 [shape = 'u32[144,128]{1,0:T(1,128)}', space=vmem, size = 0x12000, scoped, tag = 'internal scratch']
  %s0 = inlined_call_operand.hbm [shape: f32[2], index: 0, kind: input, shape index: {}]
  %s1 = inlined_call_operand.hbm [shape: f32[2,1024], index: 1, kind: input, shape index: {}]
  %s2 = inlined_call_operand.hbm [shape: f32[2,1024], index: 2, kind: output, shape index: {}]
  %s3 = sld [smem:[#allocation0]]
  $region26: #{tpu_custom_call.1} parent=0
    _
  %s5 = ssub.s32 1, %s3
  %s6 = scalar_select 0, %s5, %s3
  $region1: #{tpu_custom_call.1} parent=0
    #allocation2 [shape = 'u8[512]{0}', space=smem, size = 0x200, scoped, tag = 'input window, operand 0, single buffered']
    #allocation3 [shape = 's32[1]{0}', space=sflag, size = 0x4, scoped, tag = 'scoped memory for tpu_custom_call.1']
    #allocation4 [shape = 's32[1]{0}', space=sflag, size = 0x4, scoped, tag = 'scoped memory for tpu_custom_call.1']
    #allocation5 [shape = 's32[1]{0}', space=sflag, size = 0x4, scoped, tag = 'scoped memory for tpu_custom_call.1']
    #allocation6 [shape = 'u8[8192]{0}', space=vmem, size = 0x2000, scoped, tag = 'input window, operand 1, single buffered']
    #allocation7 [shape = 'u8[8192]{0}', space=vmem, size = 0x2000, scoped, tag = 'output window, operand 0, single buffered']
    %7 = vsyncpa [#allocation5], 0
    %8 = vsyncpa [#allocation3], 0
    %9 = vsyncpa [#allocation4], 0
    // Predicated region
    $region2: #{tpu_custom_call.1} parent=1 // pred_check
      _
    $region3: #{tpu_custom_call.1} parent=1 // pred_check_branch
      %11 = sbr.rel (0) target = $region5
    $region4: #{tpu_custom_call.1} parent=1 // pred_region
      %s13 = ssub.s32 16, 16
      %14 = vsyncadd [#allocation5], %s13
      %17 = dma.hbm_to_smem %s0, 16, [#allocation2], [#allocation5]
    $region5: #{tpu_custom_call.1} parent=1 // pred_fallthru
      _
    // Predicated region
    $region6: #{tpu_custom_call.1} parent=1 // pred_check
      _
    $region7: #{tpu_custom_call.1} parent=1 // pred_check_branch
      %19 = sbr.rel (0) target = $region9
    $region8: #{tpu_custom_call.1} parent=1 // pred_region
      %s21 = ssub.s32 256, 256
      %22 = vsyncadd [#allocation3], %s21
      %s24 = sshll.u32 [#allocation6], 4
      %s25 = int_to_ptr.vmem [resolvable:$true] %s24
      %27 = dma.hbm_to_vmem [thread:$0]  %s1, 256, %s25, [#allocation3]
    $region9: #{tpu_custom_call.1} parent=1 // pred_fallthru
      _
    // Predicated region
    $region10: #{tpu_custom_call.1} parent=1 // pred_check
      _
    $region11: #{tpu_custom_call.1} parent=1 // pred_check_branch
      %29 = sbr.rel (0) target = $region13
    $region12: #{tpu_custom_call.1} parent=1 // pred_region
      %30 = dma.done [#allocation5], 16
    $region13: #{tpu_custom_call.1} parent=1 // pred_fallthru
      _
    // Predicated region
    $region14: #{tpu_custom_call.1} parent=1 // pred_check
      _
    $region15: #{tpu_custom_call.1} parent=1 // pred_check_branch
      %32 = sbr.rel (0) target = $region17
    $region16: #{tpu_custom_call.1} parent=1 // pred_region
      %33 = dma.done [#allocation3], 256
    $region17: #{tpu_custom_call.1} parent=1 // pred_fallthru
      _
    %34 = sfence
    %s35 = sld [smem:[#allocation2]]
    %s36 = sld [smem:[#allocation2 + $0x1]]
    %v37 = vld [vmem:[#allocation6] sm:$0xff]
    %v38 = vld [vmem:[#allocation6 + $0x8] sm:$0xff]
    %v39 = vstv %s36
    %v40 = vmul.f32 %v37, %v39
    %v41 = vmul.f32 %v38, %v39
    %v42 = vstv %s35
    %v43 = vadd.f32 %v42, %v40
    %v44 = vadd.f32 %v42, %v41
    %45 = vst [vmem:[#allocation7] sm:$0xff] %v43
    %46 = vst [vmem:[#allocation7 + $0x8] sm:$0xff] %v44
    // Predicated region
    $region18: #{tpu_custom_call.1} parent=1 // pred_check
      _
    $region19: #{tpu_custom_call.1} parent=1 // pred_check_branch
      %48 = sbr.rel (0) target = $region21
    $region20: #{tpu_custom_call.1} parent=1 // pred_region
      %s50 = ssub.s32 256, 256
      %51 = vsyncadd [#allocation4], %s50
      %s53 = sshll.u32 [#allocation7], 4
      %s54 = int_to_ptr.vmem [resolvable:$true] %s53
      %56 = dma.vmem_to_hbm [thread:$0]  %s54, 256, %s2, [#allocation4]
    $region21: #{tpu_custom_call.1} parent=1 // pred_fallthru
      _
    // Predicated region
    $region22: #{tpu_custom_call.1} parent=1 // pred_check
      _
    $region23: #{tpu_custom_call.1} parent=1 // pred_check_branch
      %58 = sbr.rel (0) target = $region25
    $region24: #{tpu_custom_call.1} parent=1 // pred_region
      %59 = dma.done [#allocation4], 256
    $region25: #{tpu_custom_call.1} parent=1 // pred_fallthru
      _
    %60 = vsyncpa [#allocation3], 1
    %61 = vsyncpa [#allocation4], 1
    %62 = vsyncpa [#allocation5], 1

</llo_original>
